<compile_context>
chip_gen: v7x
topology: tpu7x:2x2x1
jax: 0.10.0
libtpu: 0.0.40
codegen_flags: <defaults>
</compile_context>

<pallas_src>
import functools

import jax
import jax.numpy as jnp
from jax.experimental import pallas as pl
from jax.experimental.pallas import tpu as pltpu


# ----------------------------------------------------------------------------
# Small helpers
# ----------------------------------------------------------------------------
def _round_up(x, m):
    return ((x + m - 1) // m) * m


def _pick_tile(full, max_tile, align):
    """Largest multiple of `align` that divides `full` and is <= max_tile.

    `full` must be a positive multiple of `align`.
    """
    t = max(align, (min(max_tile, full) // align) * align)
    while full % t:
        t -= align
    return t


def _tpu_generation():
    """Coarse TPU-generation detection for tile-table selection."""
    try:
        kind = jax.devices()[0].device_kind.lower()
    except Exception:  # pragma: no cover - e.g. interpret mode / no devices
        return "default"
    if "v5" in kind and ("lite" in kind or "e" in kind):
        return "v5e"
    if "v6" in kind:
        return "v6e"
    if "7" in kind:
        return "v7x"
    return "default"


# (tm_max, tn_max, tk_max) for bf16 inputs.
_TILE_TABLE = {
    "v5e": (512, 512, 1024),
    "v6e": (512, 512, 1024),
    "v7x": (512, 512, 512),     # 64 MiB physical VMEM -> smaller working set
    "default": (256, 256, 512),
}

# VMEM ceiling we are willing to request per generation.
_VMEM_CAP = {"v5e": 100 << 20, "v6e": 100 << 20, "v7x": 56 << 20, "default": 48 << 20}

# If K fits in a single VMEM tile, collapse the reduction axis entirely.
_K_COLLAPSE_MAX = 2048


def _vmem_limit_bytes(gen, tm, tk, tn, in_bytes, out_bytes, with_acc):
    per_step = (tm * tk + tk * tn) * in_bytes + tn * 4 + tm * tn * out_bytes
    need = 2 * per_step  # double-buffered inputs + output
    if with_acc:
        need += tm * tn * 4
    return min(_VMEM_CAP.get(gen, _VMEM_CAP["default"]),
               max(32 << 20, int(need * 1.5)))


# ----------------------------------------------------------------------------
# Kernels
# ----------------------------------------------------------------------------
def _qkv_kernel_fused_k(x_ref, w_ref, b_ref, o_ref):
    """2-D grid: K is the full extent of the tile. One dot per output tile."""
    acc = jnp.dot(x_ref[...], w_ref[...], preferred_element_type=jnp.float32)
    o_ref[...] = (acc + b_ref[...]).astype(o_ref.dtype)


def _qkv_kernel_acc_k(x_ref, w_ref, b_ref, o_ref, acc_ref):
    """3-D grid fallback for very large K: f32 accumulator, bias folded at k==0."""
    k = pl.program_id(2)

    @pl.when(k == 0)
    def _init():
        acc_ref[...] = jnp.broadcast_to(b_ref[...], acc_ref.shape)

    acc_ref[...] += jnp.dot(x_ref[...], w_ref[...],
                            preferred_element_type=jnp.float32)

    @pl.when(k == pl.num_programs(2) - 1)
    def _finalize():
        o_ref[...] = acc_ref[...].astype(o_ref.dtype)


# ----------------------------------------------------------------------------
# Tiled linear: y = x @ w_t + bias
# ----------------------------------------------------------------------------
def qkv_linear_pallas(x2d, w_t, bias, *, out_dtype=None, n_out=None,
                      tm=None, tn=None, tk=None, w_buffers=None):
    """x2d: (M, K) [bf16], w_t: (K, N_pad) [bf16], bias: (N_pad,) [f32].

    N_pad must be a multiple of 128 (done once in prepare_qkv_params).
    Returns (M, n_out) in out_dtype.
    """
    M, K = x2d.shape
    Kw, N_pad = w_t.shape
    assert Kw == K and N_pad % 128 == 0
    if out_dtype is None:
        out_dtype = x2d.dtype
    if n_out is None:
        n_out = N_pad

    gen = _tpu_generation()
    tm_max, tn_max, tk_max = _TILE_TABLE.get(gen, _TILE_TABLE["default"])
    if tm is not None:
        tm_max = tm
    if tn is not None:
        tn_max = tn
    if tk is not None:
        tk_max = tk

    in_bytes = jnp.dtype(x2d.dtype).itemsize
    out_bytes = jnp.dtype(out_dtype).itemsize

    # M: pad only to the bf16 sublane multiple (16); tiles divide M_pad exactly.
    M_pad = _round_up(M, 16)
    if M_pad != M:
        x2d = jnp.pad(x2d, ((0, M_pad - M), (0, 0)))
    tm = _pick_tile(M_pad, tm_max, 16)
    tn = _pick_tile(N_pad, tn_max, 128)

    # v7x megacore: make sure the parallel axes have >= 2 tiles total so both
    # TensorCores get work (v5e/v6e are single-TC, skip).
    if gen == "v7x" and (M_pad // tm) * (N_pad // tn) < 2:
        if N_pad >= 256:
            tn = _pick_tile(N_pad, max(128, tn // 2), 128)
        elif M_pad >= 32:
            tm = _pick_tile(M_pad, max(16, tm // 2), 16)

    bias2d = bias.reshape(1, N_pad)

    collapse_k = K <= _K_COLLAPSE_MAX

    # Optional pipeline-depth knob on the dominant (weight) DMA stream.
    w_kwargs = {}
    if w_buffers is not None and w_buffers != 2:
        w_kwargs["pipeline_mode"] = pl.Buffered(w_buffers)

    if collapse_k:
        grid = (M_pad // tm, N_pad // tn)
        in_specs = [
            pl.BlockSpec((tm, K), lambda i, j: (i, 0)),             # x tile
            pl.BlockSpec((K, tn), lambda i, j: (0, j), **w_kwargs),  # W tile
            pl.BlockSpec((1, tn), lambda i, j: (0, j)),              # bias tile
        ]
        out_specs = pl.BlockSpec((tm, tn), lambda i, j: (i, j))
        kernel = _qkv_kernel_fused_k
        scratch = []
        dim_sem = ("parallel", "parallel")
        k_eff = K
    else:
        # Large-K fallback: tile the reduction axis with an f32 accumulator.
        K_pad = _round_up(K, 128)
        tk = _pick_tile(K_pad, tk_max, 128)
        if K_pad != K:
            x2d = jnp.pad(x2d, ((0, 0), (0, K_pad - K)))
            w_t = jnp.pad(w_t, ((0, K_pad - K), (0, 0)))
        grid = (M_pad // tm, N_pad // tn, K_pad // tk)
        in_specs = [
            pl.BlockSpec((tm, tk), lambda i, j, k: (i, k)),
            pl.BlockSpec((tk, tn), lambda i, j, k: (k, j), **w_kwargs),
            pl.BlockSpec((1, tn), lambda i, j, k: (0, j)),
        ]
        out_specs = pl.BlockSpec((tm, tn), lambda i, j, k: (i, j))
        kernel = _qkv_kernel_acc_k
        scratch = [pltpu.VMEM((tm, tn), jnp.float32)]
        dim_sem = ("parallel", "parallel", "arbitrary")
        k_eff = tk

    flops = 2 * M_pad * K * N_pad
    bytes_accessed = (in_bytes * (M_pad * K + K * N_pad)
                      + out_bytes * M_pad * N_pad + 4 * N_pad)

    out = pl.pallas_call(
        kernel,
        out_shape=jax.ShapeDtypeStruct((M_pad, N_pad), out_dtype),
        grid_spec=pltpu.PrefetchScalarGridSpec(
            num_scalar_prefetch=0,
            grid=grid,
            in_specs=in_specs,
            out_specs=out_specs,
            scratch_shapes=scratch,
        ),
        compiler_params=pltpu.CompilerParams(
            dimension_semantics=dim_sem,
            vmem_limit_bytes=_vmem_limit_bytes(
                gen, tm, k_eff, tn, in_bytes, out_bytes, not collapse_k),
        ),
        cost_estimate=pl.CostEstimate(
            flops=flops, transcendentals=0, bytes_accessed=bytes_accessed),
    )(x2d, w_t, bias2d)

    if M_pad != M or n_out != N_pad:
        out = out[:M, :n_out]
    return out


# ----------------------------------------------------------------------------
# Module-level wrappers
# ----------------------------------------------------------------------------
def prepare_qkv_params(weight, bias, hidden_channels, num_heads,
                       compute_dtype=jnp.bfloat16):
    """One-time parameter prep (hoisted out of the per-call path).

    weight : (3*hidden*heads, in_channels)   (PyTorch nn.Linear layout)
    bias   : (3*hidden*heads,)

    Transposes the weight, reorders the output columns from the module's
    packing (qkv, hidden, heads) to (qkv, heads, hidden) so the post-kernel
    rearrange never moves the lane (hidden) axis, pads N to a multiple of 128
    (lane-dense tiles), and casts the weight to the bf16 compute dtype.
    """
    out_dim, in_channels = weight.shape
    assert out_dim == 3 * hidden_channels * num_heads
    w_t = weight.T.reshape(in_channels, 3, hidden_channels, num_heads)
    w_t = jnp.transpose(w_t, (0, 1, 3, 2)).reshape(in_channels, out_dim)
    b = bias.reshape(3, hidden_channels, num_heads)
    b = jnp.transpose(b, (0, 2, 1)).reshape(out_dim)

    n_pad = _round_up(out_dim, 128)
    if n_pad != out_dim:
        w_t = jnp.pad(w_t, ((0, 0), (0, n_pad - out_dim)))
        b = jnp.pad(b, (0, n_pad - out_dim))
    return w_t.astype(compute_dtype), b.astype(jnp.float32)


def multi_head_qkv_linear(inputs, w_t, bias_r, hidden_channels, num_heads):
    """Pallas equivalent of MultiHeadQKVLinear.forward.

    inputs      : (..., items, in_channels)
    w_t, bias_r : outputs of prepare_qkv_params
    Returns (q, k, v), each (..., num_heads, items, hidden_channels).
    """
    *lead, items, in_channels = inputs.shape
    n_logical = 3 * num_heads * hidden_channels

    # bf16 compute path (MXU-native on v5e/v6e/v7x); accumulation stays f32
    # inside the kernel and the output keeps the input dtype.
    x2d = inputs.reshape(-1, in_channels).astype(w_t.dtype)
    y = qkv_linear_pallas(x2d, w_t, bias_r,
                          out_dtype=inputs.dtype, n_out=n_logical)

    # Columns are packed (qkv, heads, hidden): hidden stays in the lane
    # position through the rearrange below (no lane-dim transpose).
    y = y.reshape(*lead, items, 3, num_heads, hidden_channels)
    n_lead = len(lead)
    # lead..., items, qkv, heads, hidden -> qkv, lead..., heads, items, hidden
    perm = (n_lead + 1,) + tuple(range(n_lead)) + (n_lead + 2, n_lead, n_lead + 3)
    qkv = jnp.transpose(y, perm)
    # TODO(synk): when hidden_channels % 128 == 0, emit the output directly in
    # (qkv, heads, M, hidden) layout via out_specs so this transpose (an extra
    # HBM round trip) disappears; with hidden < 128 per-head stores would be
    # lane-sparse masked vst, so the fused-N layout above is kept.
    return qkv[0], qkv[1], qkv[2]


# ----------------------------------------------------------------------------
# Self-test
# ----------------------------------------------------------------------------
if __name__ == "__main__":
    batch, items, in_channels = 2, 8, 32
    hidden_channels, num_heads = 16, 2
    out_dim = 3 * hidden_channels * num_heads

    key = jax.random.PRNGKey(0)
    kx, kw, kb = jax.random.split(key, 3)
    x = jax.random.normal(kx, (batch, items, in_channels), dtype=jnp.float32)
    # Deterministic synthetic parameters in the PyTorch nn.Linear layout.
    weight = jax.random.normal(kw, (out_dim, in_channels), dtype=jnp.float32) * 0.05
    bias = jax.random.normal(kb, (out_dim,), dtype=jnp.float32) * 0.05

    # One-time parameter preparation (transpose + column reorder + N pad + bf16).
    w_t, bias_r = prepare_qkv_params(weight, bias, hidden_channels, num_heads)

    fwd = jax.jit(
        functools.partial(
            multi_head_qkv_linear,
            hidden_channels=hidden_channels,
            num_heads=num_heads,
        )
    )
    q, k, v = fwd(x, w_t, bias_r)
    jax.block_until_ready((q, k, v))

    # Reference: exact semantics of the PyTorch module's forward + rearrange
    # (computed in f32; kernel uses bf16 inputs, hence the loosened tolerance).
    ref = x @ weight.T + bias
    ref = ref.reshape(batch, items, 3, hidden_channels, num_heads)
    ref = jnp.transpose(ref, (2, 0, 4, 1, 3))  # (qkv, batch, heads, items, hidden)

    assert q.shape == (batch, num_heads, items, hidden_channels)
    assert k.shape == (batch, num_heads, items, hidden_channels)
    assert v.shape == (batch, num_heads, items, hidden_channels)
    assert jnp.allclose(q, ref[0], atol=5e-2, rtol=5e-2)
    assert jnp.allclose(k, ref[1], atol=5e-2, rtol=5e-2)
    assert jnp.allclose(v, ref[2], atol=5e-2, rtol=5e-2)

    print("KERNEL_OK")
</pallas_src>

<mosaic_0001>
module attributes {stable_mosaic.version = 11 : i64} {
  func.func @_qkv_kernel_fused_k(%arg0: i32, %arg1: i32, %arg2: memref<16x32xbf16, #tpu.memory_space<vmem>>, %arg3: memref<32x128xbf16, #tpu.memory_space<vmem>>, %arg4: memref<1x128xf32, #tpu.memory_space<vmem>>, %arg5: memref<16x128xf32, #tpu.memory_space<vmem>>) attributes {dimension_semantics = [#tpu.dimension_semantics<parallel>, #tpu.dimension_semantics<parallel>], iteration_bounds = array<i64: 1, 1>, scalar_prefetch = 0 : i64, scratch_operands = 0 : i64, tpu.core_type = #tpu.core_type<tc>, window_params = [{transform_indices = @transform_0, window_bounds = array<i64: 16, 32>}, {transform_indices = @transform_1, window_bounds = array<i64: 32, 128>}, {transform_indices = @transform_2, window_bounds = array<i64: 1, 128>}, {transform_indices = @transform_3, window_bounds = array<i64: 16, 128>}]} {
    %c0 = arith.constant 0 : index
    %c0_0 = arith.constant 0 : index
    %0 = vector.load %arg2[%c0, %c0_0] : memref<16x32xbf16, #tpu.memory_space<vmem>>, vector<16x32xbf16>
    %c0_1 = arith.constant 0 : index
    %c0_2 = arith.constant 0 : index
    %1 = vector.load %arg3[%c0_1, %c0_2] : memref<32x128xbf16, #tpu.memory_space<vmem>>, vector<32x128xbf16>
    %cst = arith.constant dense<0.000000e+00> : vector<16x128xf32>
    %2 = tpu.matmul %0, %1, %cst {dimension_numbers = #tpu.dot_dimension_numbers<[1], [0], [0], [1], [0, 0, 1, 1], [], []>} : vector<16x32xbf16>, vector<32x128xbf16>, vector<16x128xf32> -> vector<16x128xf32>
    %c0_3 = arith.constant 0 : index
    %c0_4 = arith.constant 0 : index
    %3 = vector.load %arg4[%c0_3, %c0_4] : memref<1x128xf32, #tpu.memory_space<vmem>>, vector<1x128xf32>
    %4 = vector.broadcast %3 : vector<1x128xf32> to vector<16x128xf32>
    %5 = arith.addf %2, %4 : vector<16x128xf32>
    %c0_5 = arith.constant 0 : index
    %c0_6 = arith.constant 0 : index
    %6 = vector.load %arg5[%c0_5, %c0_6] : memref<16x128xf32, #tpu.memory_space<vmem>>, vector<16x128xf32>
    tpu.vector_store %arg5[%c0_5, %c0_6], %5 {strides = array<i32>} : memref<16x128xf32, #tpu.memory_space<vmem>>, vector<16x128xf32>,
    return
  }
  func.func @transform_0(%arg0: i32, %arg1: i32) -> (i32, i32) {
    %c0_i32 = arith.constant 0 : i32
    %c0_i32_0 = arith.constant 0 : i32
    return %arg0, %c0_i32 : i32, i32
  }
  func.func @transform_1(%arg0: i32, %arg1: i32) -> (i32, i32) {
    %c0_i32 = arith.constant 0 : i32
    %c0_i32_0 = arith.constant 0 : i32
    return %c0_i32, %arg1 : i32, i32
  }
  func.func @transform_2(%arg0: i32, %arg1: i32) -> (i32, i32) {
    %c0_i32 = arith.constant 0 : i32
    %c0_i32_0 = arith.constant 0 : i32
    return %c0_i32, %arg1 : i32, i32
  }
  func.func @transform_3(%arg0: i32, %arg1: i32) -> (i32, i32) {
    %c0_i32 = arith.constant 0 : i32
    return %arg0, %arg1 : i32, i32
  }
}

</mosaic_0001>

<llo_original>
// kernel: multi_head_qkv_linear.1
$region0: #{multi_head_qkv_linear.1}
  #allocation0 [shape = 'u32[]', space=smem, size = 0x4, offset = 0x4, fixed_abs, tag = 'smem constant byte address 0x4 - core index']
  #allocation1 [shape = 'u32[144,128]{1,0:T(1,128)}', space=vmem, size = 0x12000, scoped, tag = 'internal scratch']
  %s0 = inlined_call_operand.vmem [shape: bf16[16,32], index: 0, kind: input, shape index: {}]
  %s1 = inlined_call_operand.vmem [shape: bf16[32,128], index: 1, kind: input, shape index: {}]
  %s2 = inlined_call_operand.vmem [shape: f32[1,128], index: 2, kind: input, shape index: {}]
  %s3 = inlined_call_operand.vmem [shape: f32[16,128], index: 3, kind: output, shape index: {}]
  %s4 = sld [smem:[#allocation0]]
  $region22: #{multi_head_qkv_linear.1} parent=0
    _
  %s6 = ssub.s32 1, %s4
  %s7 = scalar_select 0, %s6, %s4
  // Predicated region
  $region2: #{multi_head_qkv_linear.1} parent=0 // pred_check
    _
  $region3: #{multi_head_qkv_linear.1} parent=0 // pred_check_branch
    %9 = sbr.rel (0) target = $region5
  $region4: #{multi_head_qkv_linear.1} parent=0 // pred_region
    _
  $region5: #{multi_head_qkv_linear.1} parent=0 // pred_fallthru
    _
  // Predicated region
  $region6: #{multi_head_qkv_linear.1} parent=0 // pred_check
    _
  $region7: #{multi_head_qkv_linear.1} parent=0 // pred_check_branch
    %11 = sbr.rel (0) target = $region9
  $region8: #{multi_head_qkv_linear.1} parent=0 // pred_region
    _
  $region9: #{multi_head_qkv_linear.1} parent=0 // pred_fallthru
    _
  // Predicated region
  $region10: #{multi_head_qkv_linear.1} parent=0 // pred_check
    _
  $region11: #{multi_head_qkv_linear.1} parent=0 // pred_check_branch
    %13 = sbr.rel (0) target = $region13
  $region12: #{multi_head_qkv_linear.1} parent=0 // pred_region
    _
  $region13: #{multi_head_qkv_linear.1} parent=0 // pred_fallthru
    _
  %v15 = vld [vmem:[%s0] sm:$0xf]
  %v16 = vld [vmem:[%s0 + $0x4] sm:$0xf]
  %v17 = vld [vmem:[%s1] sm:$0xf]
  %v18 = vld [vmem:[%s1 + $0x4] sm:$0xf]
  %v19 = vld [vmem:[%s1 + $0x8] sm:$0xf]
  %v20 = vld [vmem:[%s1 + $0xc] sm:$0xf]
  %v21 = vld [vmem:[%s2] sm:$0x1]
  %v23 = vlaneseq
  %v24 = vshrl.u32 %v23, 7
  %v25 = vsub.s32 0, %v24
  %v26 = vrot.slane %v21, %v25
  %v30 = vunpack.c.l.b16 %v15
  %v31 = vunpack.c.l.b16 %v16
  %v32 = vpack.c.b16 %v31, %v30
  %v37 = vunpack.c.l.b16 %v17
  %v38 = vunpack.c.l.b16 %v18
  %v39 = vunpack.c.l.b16 %v19
  %v40 = vunpack.c.l.b16 %v20
  %v41 = vpack.c.b16 %v38, %v37
  %v42 = vpack.c.b16 %v40, %v39
  %vm45 = vcmask 261120
  %v47 = vsel %vm45, %v32, 0
  %49 = vmatprep.subr.bf16.mxu0 0
  %50 = vmatpush1.bf16.msra.mxu0 %v41
  %51 = vmatprep.subr.bf16.mxu0 0
  %52 = vmatpush1.bf16.msra.mxu0 %v42
  %53 = vmatprep.subr.bf16.mxu0 0
  %54 = vmatpush1.bf16.msra.mxu0 0
  %55 = vmatprep.subr.bf16.mxu0 0
  %56 = vmatpush1.bf16.msra.mxu0 0
  %57 = vmatprep.subr.bf16.mxu0 0
  %58 = vmatpush1.bf16.msra.mxu0 0
  %59 = vmatprep.subr.bf16.mxu0 0
  %60 = vmatpush1.bf16.msra.mxu0 0
  %61 = vmatprep.subr.bf16.mxu0 0
  %62 = vmatpush1.bf16.msra.mxu0 0
  %63 = vmatprep.subr.bf16.mxu0 0
  %64 = vmatpush1.bf16.msra.mxu0 0
  %65 = vmatprep.subr.bf16.mxu0 0
  %66 = vmatpush1.bf16.msra.mxu0 0
  %67 = vmatprep.subr.bf16.mxu0 0
  %68 = vmatpush1.bf16.msra.mxu0 0
  %69 = vmatprep.subr.bf16.mxu0 0
  %70 = vmatpush1.bf16.msra.mxu0 0
  %71 = vmatprep.subr.bf16.mxu0 0
  %72 = vmatpush1.bf16.msra.mxu0 0
  %73 = vmatprep.subr.bf16.mxu0 0
  %74 = vmatpush1.bf16.msra.mxu0 0
  %75 = vmatprep.subr.bf16.mxu0 0
  %76 = vmatpush1.bf16.msra.mxu0 0
  %77 = vmatprep.subr.bf16.mxu0 0
  %78 = vmatpush1.bf16.msra.mxu0 0
  %79 = vmatprep.subr.bf16.mxu0 0
  %80 = vmatpush1.bf16.msra.mxu0 0
  %81 = vmatprep.mubr.bf16.mxu0 0
  %82 = vmatmul.mubr.bf16.gmra.mrb[0].mxu0 %v47
  %v83 = vpop.f32.mrb[0].mxu0
  %v84 = vadd.f32 %v26, %v83
  %v85 = vpop.f32.mrb[0].mxu0
  %v86 = vpop.f32.mrb[0].mxu0
  %v87 = vadd.f32 %v26, %v86
  %v88 = vpop.f32.mrb[0].mxu0
  %89 = vdwg.mxu0
  %90 = vst [vmem:[%s3] sm:$0xff] %v84
  %91 = vst [vmem:[%s3 + $0x8] sm:$0xff] %v87
  // Predicated region
  $region14: #{multi_head_qkv_linear.1} parent=0 // pred_check
    _
  $region15: #{multi_head_qkv_linear.1} parent=0 // pred_check_branch
    %93 = sbr.rel (0) target = $region17
  $region16: #{multi_head_qkv_linear.1} parent=0 // pred_region
    _
  $region17: #{multi_head_qkv_linear.1} parent=0 // pred_fallthru
    _
  // Predicated region
  $region18: #{multi_head_qkv_linear.1} parent=0 // pred_check
    _
  $region19: #{multi_head_qkv_linear.1} parent=0 // pred_check_branch
    %95 = sbr.rel (0) target = $region21
  $region20: #{multi_head_qkv_linear.1} parent=0 // pred_region
    _
  $region21: #{multi_head_qkv_linear.1} parent=0 // pred_fallthru
    _

</llo_original>
